<compile_context>
chip_gen: v6e
topology: v6e:2x2x1
jax: 0.10.0
libtpu: 0.0.40
codegen_flags: <defaults>
</compile_context>

<pallas_src>
import math
from functools import partial

import jax
import jax.numpy as jnp
from jax.experimental import pallas as pl
from jax.experimental.pallas import tpu as pltpu

HIDDEN = 128          # fixed by the module definition (Linear(latent_dim, 128))
BATCH_BLOCK = 256     # rows per kernel invocation in the large-batch path


def _round_up(x: int, m: int) -> int:
    return (x + m - 1) // m * m


# ----------------------------------------------------------------------------
# Kernel body: works for both the single-block and the batch-tiled call.
#   x_ref : (TB, D)        f32
#   w1_ref: (D, 128)       bf16
#   b_ref : (2, 128)       f32   (row 0 = b1, row 1 = b2 padded with -1e30)
#   w2_ref: (128, Np=128)  bf16  (zero-padded class columns)
#   o_ref : (TB, n_classes) f32
# ----------------------------------------------------------------------------
def _mlp_softmax_kernel(x_ref, w1_ref, b_ref, w2_ref, o_ref):
    # fc1 (bf16 MXU inputs, f32 accumulation) + bias + ReLU.
    h = jnp.dot(x_ref[...].astype(jnp.bfloat16), w1_ref[...],
                preferred_element_type=jnp.float32)
    h = jnp.maximum(h + b_ref[0:1, :], 0.0)

    # Dropout(0.5): identity in inference mode (see TODO above).

    # fc2
    logits = jnp.dot(h.astype(jnp.bfloat16), w2_ref[...],
                     preferred_element_type=jnp.float32)
    logits = logits + b_ref[1:2, :]

    # softmax over the lane-padded class axis.  Padded class lanes carry a
    # bias of -1e30 (f32), so exp(logit - max) is exactly 0 there and the
    # softmax over the real classes is unchanged.
    m = jnp.max(logits, axis=-1, keepdims=True)
    e = jnp.exp(logits - m)
    denom = jnp.sum(e, axis=-1, keepdims=True)
    probs = e * pl.reciprocal(denom, approx=True)

    # Store only the real classes (narrow store is negligible at this size
    # and avoids any wrapper-side slice HLO).
    o_ref[...] = probs[:, : o_ref.shape[-1]].astype(o_ref.dtype)


# ----------------------------------------------------------------------------
# pallas_call wrappers
# ----------------------------------------------------------------------------
def _fused_single_block(x, w1p, bp, w2p, n_classes):
    """B <= BATCH_BLOCK: whole problem in one block, no grid, no padding."""
    B = x.shape[0]
    vmem = pl.BlockSpec(memory_space=pltpu.MemorySpace.VMEM)
    return pl.pallas_call(
        _mlp_softmax_kernel,
        out_shape=jax.ShapeDtypeStruct((B, n_classes), jnp.float32),
        in_specs=[vmem, vmem, vmem, vmem],
        out_specs=vmem,
    )(x, w1p, bp, w2p)


def _fused_batched(xp, w1p, bp, w2p, n_classes, tb):
    """B > BATCH_BLOCK: grid over the batch, 'parallel' so v7x uses both TCs."""
    Bp, D = xp.shape
    Np = w2p.shape[1]
    return pl.pallas_call(
        _mlp_softmax_kernel,
        out_shape=jax.ShapeDtypeStruct((Bp, n_classes), jnp.float32),
        grid=(Bp // tb,),
        in_specs=[
            pl.BlockSpec((tb, D), lambda i: (i, 0)),
            pl.BlockSpec((D, HIDDEN), lambda i: (0, 0)),
            pl.BlockSpec((2, HIDDEN), lambda i: (0, 0)),
            pl.BlockSpec((HIDDEN, Np), lambda i: (0, 0)),
        ],
        out_specs=pl.BlockSpec((tb, n_classes), lambda i: (i, 0)),
        compiler_params=pltpu.CompilerParams(
            dimension_semantics=("parallel",)),
    )(xp, w1p, bp, w2p)


# ----------------------------------------------------------------------------
# parameter init / prep (prep is done ONCE, outside the jitted forward)
# ----------------------------------------------------------------------------
def init_params(key, latent_dim, n_classes):
    k1, k2, k3, k4 = jax.random.split(key, 4)
    s1 = 1.0 / math.sqrt(latent_dim)
    s2 = 1.0 / math.sqrt(HIDDEN)
    return dict(
        w1=jax.random.normal(k1, (latent_dim, HIDDEN), jnp.float32) * s1,
        b1=jax.random.normal(k2, (HIDDEN,), jnp.float32) * s1,
        w2=jax.random.normal(k3, (HIDDEN, n_classes), jnp.float32) * s2,
        b2=jax.random.normal(k4, (n_classes,), jnp.float32) * s2,
    )


def prepare_params(params):
    latent_dim = params["w1"].shape[0]
    n_classes = params["w2"].shape[1]
    Np = _round_up(n_classes, 128)

    # Weights in bf16 (MXU-native); no K padding.
    w1p = params["w1"].astype(jnp.bfloat16)                       # (D, 128)
    w2p = jnp.pad(params["w2"],
                  ((0, 0), (0, Np - n_classes))).astype(jnp.bfloat16)  # (128, Np)

    # Both biases packed into one (2, 128) f32 array; padded class lanes of
    # b2 get -1e30 so they vanish under softmax.  Biases stay f32.
    b1p = params["b1"].reshape(1, HIDDEN)
    b2p = jnp.pad(params["b2"], (0, Np - n_classes),
                  constant_values=-1e30).reshape(1, Np)
    bp = jnp.concatenate([b1p, b2p], axis=0)                      # (2, 128)

    return dict(w1p=w1p, bp=bp, w2p=w2p,
                latent_dim=latent_dim, n_classes=n_classes)


# ----------------------------------------------------------------------------
# forward pass
# ----------------------------------------------------------------------------
def source1_classifier_forward(prepped, x):
    B, D = x.shape
    assert D == prepped["latent_dim"]
    n_classes = prepped["n_classes"]
    x = x.astype(jnp.float32)

    if B <= BATCH_BLOCK:
        # No padding, no slicing: the kernel consumes (B, D) and produces
        # (B, n_classes) directly.
        return _fused_single_block(x, prepped["w1p"], prepped["bp"],
                                   prepped["w2p"], n_classes)

    # Large batch: tile the batch with 256-row blocks on a parallel grid axis.
    Bp = _round_up(B, BATCH_BLOCK)
    xp = jnp.pad(x, ((0, Bp - B), (0, 0)))
    out = _fused_batched(xp, prepped["w1p"], prepped["bp"], prepped["w2p"],
                         n_classes, BATCH_BLOCK)
    return out[:B]


# ----------------------------------------------------------------------------
# main
# ----------------------------------------------------------------------------
if __name__ == "__main__":
    LATENT_DIM = 32
    N_CLASSES = 7
    BATCH = 2

    key = jax.random.PRNGKey(0)
    kp, kx, kx2 = jax.random.split(key, 3)
    params = init_params(kp, LATENT_DIM, N_CLASSES)
    prepped = prepare_params(params)

    # -- references (eval mode: dropout = identity) ---------------------------
    def ref_forward_f32(xin):
        h = jnp.maximum(
            jnp.dot(xin, params["w1"],
                    precision=jax.lax.Precision.HIGHEST) + params["b1"], 0.0)
        logits = jnp.dot(h, params["w2"],
                         precision=jax.lax.Precision.HIGHEST) + params["b2"]
        return jax.nn.softmax(logits, axis=1)

    def ref_forward_bf16(xin):  # same weight precision as the kernel
        h = jnp.dot(xin.astype(jnp.bfloat16),
                    params["w1"].astype(jnp.bfloat16),
                    preferred_element_type=jnp.float32) + params["b1"]
        h = jnp.maximum(h, 0.0)
        logits = jnp.dot(h.astype(jnp.bfloat16),
                         params["w2"].astype(jnp.bfloat16),
                         preferred_element_type=jnp.float32) + params["b2"]
        return jax.nn.softmax(logits, axis=1)

    fwd = jax.jit(partial(source1_classifier_forward, prepped))

    # -- small-batch (single-block) path --------------------------------------
    x = jax.random.normal(kx, (BATCH, LATENT_DIM), jnp.float32)
    out = jax.block_until_ready(fwd(x))

    assert out.shape == (BATCH, N_CLASSES), out.shape
    assert bool(jnp.all(jnp.isfinite(out)))
    assert bool(jnp.allclose(jnp.sum(out, axis=-1), 1.0, atol=1e-2))
    assert bool(jnp.allclose(out, ref_forward_bf16(x), atol=5e-3, rtol=5e-3))
    assert bool(jnp.allclose(out, ref_forward_f32(x), atol=3e-2, rtol=3e-2))

    # -- large-batch (batch-tiled, parallel grid) path -------------------------
    BIG = 520
    xb = jax.random.normal(kx2, (BIG, LATENT_DIM), jnp.float32)
    out_big = jax.block_until_ready(fwd(xb))

    assert out_big.shape == (BIG, N_CLASSES), out_big.shape
    assert bool(jnp.all(jnp.isfinite(out_big)))
    assert bool(jnp.allclose(jnp.sum(out_big, axis=-1), 1.0, atol=1e-2))
    assert bool(jnp.allclose(out_big, ref_forward_bf16(xb), atol=5e-3, rtol=5e-3))

    print("KERNEL_OK")
</pallas_src>

<mosaic_0001>
module attributes {stable_mosaic.version = 11 : i64} {
  func.func @_mlp_softmax_kernel(%arg0: memref<2x32xf32, #tpu.memory_space<vmem>>, %arg1: memref<32x128xbf16, #tpu.memory_space<vmem>>, %arg2: memref<2x128xf32, #tpu.memory_space<vmem>>, %arg3: memref<128x128xbf16, #tpu.memory_space<vmem>>, %arg4: memref<2x7xf32, #tpu.memory_space<vmem>>) attributes {dimension_semantics = [], scalar_prefetch = 0 : i64, scratch_operands = 0 : i64, tpu.core_type = #tpu.core_type<tc>} {
    %c0 = arith.constant 0 : index
    %c0_0 = arith.constant 0 : index
    %0 = vector.load %arg0[%c0, %c0_0] : memref<2x32xf32, #tpu.memory_space<vmem>>, vector<2x32xf32>
    %1 = arith.truncf %0 : vector<2x32xf32> to vector<2x32xbf16>
    %c0_1 = arith.constant 0 : index
    %c0_2 = arith.constant 0 : index
    %2 = vector.load %arg1[%c0_1, %c0_2] : memref<32x128xbf16, #tpu.memory_space<vmem>>, vector<32x128xbf16>
    %cst = arith.constant dense<0.000000e+00> : vector<2x128xf32>
    %3 = tpu.matmul %1, %2, %cst {dimension_numbers = #tpu.dot_dimension_numbers<[1], [0], [0], [1], [0, 0, 1, 1], [], []>} : vector<2x32xbf16>, vector<32x128xbf16>, vector<2x128xf32> -> vector<2x128xf32>
    %c0_3 = arith.constant 0 : index
    %c0_4 = arith.constant 0 : index
    %4 = vector.load %arg2[%c0_3, %c0_4] : memref<2x128xf32, #tpu.memory_space<vmem>>, vector<1x128xf32>
    %5 = vector.broadcast %4 : vector<1x128xf32> to vector<2x128xf32>
    %6 = arith.addf %3, %5 : vector<2x128xf32>
    %cst_5 = arith.constant 0.000000e+00 : f32
    %7 = vector.broadcast %cst_5 : f32 to vector<2x128xf32>
    %8 = arith.maximumf %6, %7 : vector<2x128xf32>
    %9 = arith.truncf %8 : vector<2x128xf32> to vector<2x128xbf16>
    %c0_6 = arith.constant 0 : index
    %c0_7 = arith.constant 0 : index
    %10 = vector.load %arg3[%c0_6, %c0_7] : memref<128x128xbf16, #tpu.memory_space<vmem>>, vector<128x128xbf16>
    %cst_8 = arith.constant dense<0.000000e+00> : vector<2x128xf32>
    %11 = tpu.matmul %9, %10, %cst_8 {dimension_numbers = #tpu.dot_dimension_numbers<[1], [0], [0], [1], [0, 0, 1, 1], [], []>} : vector<2x128xbf16>, vector<128x128xbf16>, vector<2x128xf32> -> vector<2x128xf32>
    %c1 = arith.constant 1 : index
    %c0_9 = arith.constant 0 : index
    %12 = vector.load %arg2[%c1, %c0_9] : memref<2x128xf32, #tpu.memory_space<vmem>>, vector<1x128xf32>
    %13 = vector.broadcast %12 : vector<1x128xf32> to vector<2x128xf32>
    %14 = arith.addf %11, %13 : vector<2x128xf32>
    %cst_10 = arith.constant dense<0xFF800000> : vector<2xf32>
    %15 = vector.multi_reduction <maximumf>, %14, %cst_10 [1] : vector<2x128xf32> to vector<2xf32>
    %16 = vector.shape_cast %15 : vector<2xf32> to vector<2x1xf32>
    %17 = vector.broadcast %16 : vector<2x1xf32> to vector<2x128xf32>
    %18 = arith.subf %14, %17 : vector<2x128xf32>
    %19 = math.exp %18 : vector<2x128xf32>
    %cst_11 = arith.constant dense<0.000000e+00> : vector<2xf32>
    %20 = vector.multi_reduction <add>, %19, %cst_11 [1] : vector<2x128xf32> to vector<2xf32>
    %21 = vector.shape_cast %20 : vector<2xf32> to vector<2x1xf32>
    %22 = tpu.reciprocal %21 {approx = true} : vector<2x1xf32> -> vector<2x1xf32>
    %23 = vector.broadcast %22 : vector<2x1xf32> to vector<2x128xf32>
    %24 = arith.mulf %19, %23 : vector<2x128xf32>
    %25 = vector.extract_strided_slice %24 {offsets = [0, 0], sizes = [2, 7], strides = [1, 1]} : vector<2x128xf32> to vector<2x7xf32>
    %c0_12 = arith.constant 0 : index
    %c0_13 = arith.constant 0 : index
    %26 = vector.load %arg4[%c0_12, %c0_13] : memref<2x7xf32, #tpu.memory_space<vmem>>, vector<2x7xf32>
    tpu.vector_store %arg4[%c0_12, %c0_13], %25 {strides = array<i32>} : memref<2x7xf32, #tpu.memory_space<vmem>>, vector<2x7xf32>,
    return
  }
}

</mosaic_0001>

<llo_original>
// kernel: source1_classifier_forward.1
$region0: #{source1_classifier_forward.1}
  #allocation0 [shape = 'u32[]', space=smem, size = 0x4, offset = 0x4, fixed_abs, tag = 'smem constant byte address 0x4 - core index']
  #allocation1 [shape = 'u32[144,128]{1,0:T(1,128)}', space=vmem, size = 0x12000, scoped, tag = 'internal scratch']
  %s0 = inlined_call_operand.hbm [shape: f32[2,32], index: 0, kind: input, shape index: {}]
  %s1 = inlined_call_operand.hbm [shape: bf16[32,128], index: 1, kind: input, shape index: {}]
  %s2 = inlined_call_operand.vmem [shape: f32[2,128], index: 2, kind: input, shape index: {}]
  %s3 = inlined_call_operand.hbm [shape: bf16[128,128], index: 3, kind: input, shape index: {}]
  %s4 = inlined_call_operand.hbm [shape: f32[2,7], index: 4, kind: output, shape index: {}]
  %s5 = sld [smem:[#allocation0]]
  $region38: #{source1_classifier_forward.1} parent=0
    _
  %s7 = ssub.s32 1, %s5
  %s8 = scalar_select 0, %s7, %s5
  $region1: #{source1_classifier_forward.1} parent=0
    #allocation2 [shape = 'u8[1024]{0}', space=vmem, size = 0x400, scoped, tag = 'input window, operand 0, single buffered']
    #allocation3 [shape = 's32[1]{0}', space=sflag, size = 0x4, scoped, tag = 'scoped memory for source1_classifier_forward.1']
    #allocation4 [shape = 's32[1]{0}', space=sflag, size = 0x4, scoped, tag = 'scoped memory for source1_classifier_forward.1']
    #allocation5 [shape = 'u8[8192]{0}', space=vmem, size = 0x2000, scoped, tag = 'input window, operand 1, single buffered']
    #allocation6 [shape = 's32[1]{0}', space=sflag, size = 0x4, scoped, tag = 'scoped memory for source1_classifier_forward.1']
    #allocation7 [shape = 'u8[32768]{0}', space=vmem, size = 0x8000, scoped, tag = 'input window, operand 3, single buffered']
    #allocation8 [shape = 'u8[1024]{0}', space=vmem, size = 0x400, scoped, tag = 'output window, operand 0, single buffered']
    %9 = vsyncpa [#allocation3], 0
    %10 = vsyncpa [#allocation6], 0
    %11 = vsyncpa [#allocation4], 0
    // Predicated region
    $region2: #{source1_classifier_forward.1} parent=1 // pred_check
      _
    $region3: #{source1_classifier_forward.1} parent=1 // pred_check_branch
      %13 = sbr.rel (0) target = $region5
    $region4: #{source1_classifier_forward.1} parent=1 // pred_region
      %s15 = ssub.s32 32, 32
      %16 = vsyncadd [#allocation3], %s15
      %s18 = sshll.u32 [#allocation2], 4
      %s19 = int_to_ptr.vmem [resolvable:$true] %s18
      %21 = dma.hbm_to_vmem [thread:$0]  %s0, 32, %s19, [#allocation3]
    $region5: #{source1_classifier_forward.1} parent=1 // pred_fallthru
      _
    // Predicated region
    $region6: #{source1_classifier_forward.1} parent=1 // pred_check
      _
    $region7: #{source1_classifier_forward.1} parent=1 // pred_check_branch
      %23 = sbr.rel (0) target = $region9
    $region8: #{source1_classifier_forward.1} parent=1 // pred_region
      %s25 = ssub.s32 256, 256
      %26 = vsyncadd [#allocation6], %s25
      %s27 = sshll.u32 [#allocation5], 4
      %s28 = int_to_ptr.vmem [resolvable:$true] %s27
      %33 = dma.hbm_to_vmem [thread:$0]  %s1, 256, %s28, [#allocation6], 64, 64, 4
    $region9: #{source1_classifier_forward.1} parent=1 // pred_fallthru
      _
    // Predicated region
    $region10: #{source1_classifier_forward.1} parent=1 // pred_check
      _
    $region11: #{source1_classifier_forward.1} parent=1 // pred_check_branch
      %35 = sbr.rel (0) target = $region13
    $region12: #{source1_classifier_forward.1} parent=1 // pred_region
      _
    $region13: #{source1_classifier_forward.1} parent=1 // pred_fallthru
      _
    // Predicated region
    $region14: #{source1_classifier_forward.1} parent=1 // pred_check
      _
    $region15: #{source1_classifier_forward.1} parent=1 // pred_check_branch
      %37 = sbr.rel (0) target = $region17
    $region16: #{source1_classifier_forward.1} parent=1 // pred_region
      %s39 = ssub.s32 1024, 1024
      %40 = vsyncadd [#allocation6], %s39
      %s41 = sshll.u32 [#allocation7], 4
      %s42 = int_to_ptr.vmem [resolvable:$true] %s41
      %47 = dma.hbm_to_vmem [thread:$0]  %s3, 1024, %s42, [#allocation6], 64, 64, 4
    $region17: #{source1_classifier_forward.1} parent=1 // pred_fallthru
      _
    // Predicated region
    $region18: #{source1_classifier_forward.1} parent=1 // pred_check
      _
    $region19: #{source1_classifier_forward.1} parent=1 // pred_check_branch
      %49 = sbr.rel (0) target = $region21
    $region20: #{source1_classifier_forward.1} parent=1 // pred_region
      %50 = dma.done [#allocation3], 32
    $region21: #{source1_classifier_forward.1} parent=1 // pred_fallthru
      _
    // Predicated region
    $region22: #{source1_classifier_forward.1} parent=1 // pred_check
      _
    $region23: #{source1_classifier_forward.1} parent=1 // pred_check_branch
      %52 = sbr.rel (0) target = $region25
    $region24: #{source1_classifier_forward.1} parent=1 // pred_region
      %53 = dma.done [#allocation6], 256
    $region25: #{source1_classifier_forward.1} parent=1 // pred_fallthru
      _
    // Predicated region
    $region26: #{source1_classifier_forward.1} parent=1 // pred_check
      _
    $region27: #{source1_classifier_forward.1} parent=1 // pred_check_branch
      %55 = sbr.rel (0) target = $region29
    $region28: #{source1_classifier_forward.1} parent=1 // pred_region
      %56 = dma.done [#allocation6], 1024
    $region29: #{source1_classifier_forward.1} parent=1 // pred_fallthru
      _
    %v58 = vld [vmem:[#allocation2] sm:$0x3]
    %v59 = vpack.c.bf16 %v58, %v58
    %v60 = vld [vmem:[#allocation5] sm:$0xf]
    %v61 = vld [vmem:[#allocation5 + $0x4] sm:$0xf]
    %v62 = vld [vmem:[#allocation5 + $0x8] sm:$0xf]
    %v63 = vld [vmem:[#allocation5 + $0xc] sm:$0xf]
    %v64 = vld [vmem:[%s2] sm:$0x1]
    %v65 = vlaneseq
    %v66 = vshrl.u32 %v65, 7
    %v67 = vsub.s32 0, %v66
    %v68 = vrot.slane %v64, %v67
    %v73 = vunpack.c.l.b16 %v60
    %v74 = vunpack.c.l.b16 %v61
    %v75 = vunpack.c.l.b16 %v62
    %v76 = vunpack.c.l.b16 %v63
    %v77 = vpack.c.b16 %v74, %v73
    %v78 = vpack.c.b16 %v76, %v75
    %vm81 = vcmask 261120
    %v83 = vsel %vm81, %v59, 0
    %85 = vmatprep.subr.bf16.mxu0 0
    %86 = vmatpush1.bf16.msra.mxu0 0
    %87 = vmatprep.subr.bf16.mxu0 0
    %88 = vmatpush1.bf16.msra.mxu0 0
    %89 = vmatprep.subr.bf16.mxu0 0
    %90 = vmatpush1.bf16.msra.mxu0 0
    %91 = vmatprep.subr.bf16.mxu0 0
    %92 = vmatpush1.bf16.msra.mxu0 0
    %93 = vmatprep.subr.bf16.mxu0 0
    %94 = vmatpush1.bf16.msra.mxu0 0
    %95 = vmatprep.subr.bf16.mxu0 0
    %96 = vmatpush1.bf16.msra.mxu0 0
    %97 = vmatprep.subr.bf16.mxu0 0
    %98 = vmatpush1.bf16.msra.mxu0 %v78
    %99 = vmatprep.subr.bf16.mxu0 0
    %100 = vmatpush1.bf16.msra.mxu0 %v77
    %101 = vmatprep.subr.bf16.mxu0 0
    %102 = vmatpush2.bf16.msra.mxu0 0
    %103 = vmatprep.subr.bf16.mxu0 0
    %104 = vmatpush2.bf16.msra.mxu0 0
    %105 = vmatprep.subr.bf16.mxu0 0
    %106 = vmatpush2.bf16.msra.mxu0 0
    %107 = vmatprep.subr.bf16.mxu0 0
    %108 = vmatpush2.bf16.msra.mxu0 0
    %109 = vmatprep.subr.bf16.mxu0 0
    %110 = vmatpush2.bf16.msra.mxu0 0
    %111 = vmatprep.subr.bf16.mxu0 0
    %112 = vmatpush2.bf16.msra.mxu0 0
    %113 = vmatprep.subr.bf16.mxu0 0
    %114 = vmatpush2.bf16.msra.mxu0 0
    %115 = vmatprep.subr.bf16.mxu0 0
    %116 = vmatpush2.bf16.msra.mxu0 0
    %117 = vmatprep.mubr.bf16.mxu0 0
    %118 = vmatmul.mubr.bf16.gmra.mxu0 %v83
    %v119 = vpop.f32.mrf.mxu0
    %v120 = vadd.f32 %v68, %v119
    %v121 = vpop.f32.mrf.mxu0
    %v122 = vpop.f32.mrf.mxu0
    %v123 = vpop.f32.mrf.mxu0
    %124 = vdwg.mxu0
    %v125 = vmax.f32 %v120, 0.0
    %v126 = vpack.c.bf16 %v125, %v125
    %v127 = vld [vmem:[#allocation7] sm:$0xf]
    %v128 = vld [vmem:[#allocation7 + $0x4] sm:$0xf]
    %v129 = vld [vmem:[#allocation7 + $0x8] sm:$0xf]
    %v130 = vld [vmem:[#allocation7 + $0xc] sm:$0xf]
    %v131 = vld [vmem:[#allocation7 + $0x10] sm:$0xf]
    %v132 = vld [vmem:[#allocation7 + $0x14] sm:$0xf]
    %v133 = vld [vmem:[#allocation7 + $0x18] sm:$0xf]
    %v134 = vld [vmem:[#allocation7 + $0x1c] sm:$0xf]
    %v135 = vld [vmem:[#allocation7 + $0x20] sm:$0xf]
    %v136 = vld [vmem:[#allocation7 + $0x24] sm:$0xf]
    %v137 = vld [vmem:[#allocation7 + $0x28] sm:$0xf]
    %v138 = vld [vmem:[#allocation7 + $0x2c] sm:$0xf]
    %v139 = vld [vmem:[#allocation7 + $0x30] sm:$0xf]
    %v140 = vld [vmem:[#allocation7 + $0x34] sm:$0xf]
    %v141 = vld [vmem:[#allocation7 + $0x38] sm:$0xf]
    %v142 = vld [vmem:[#allocation7 + $0x3c] sm:$0xf]
    %v143 = vld [vmem:[%s2 + $0x1] sm:$0x1]
    %v144 = vlaneseq
    %v145 = vshrl.u32 %v144, 7
    %v146 = vsub.s32 0, %v145
    %v147 = vrot.slane %v143, %v146
    %v164 = vunpack.c.l.b16 %v127
    %v165 = vunpack.c.l.b16 %v128
    %v166 = vunpack.c.l.b16 %v129
    %v167 = vunpack.c.l.b16 %v130
    %v168 = vunpack.c.l.b16 %v131
    %v169 = vunpack.c.l.b16 %v132
    %v170 = vunpack.c.l.b16 %v133
    %v171 = vunpack.c.l.b16 %v134
    %v172 = vunpack.c.l.b16 %v135
    %v173 = vunpack.c.l.b16 %v136
    %v174 = vunpack.c.l.b16 %v137
    %v175 = vunpack.c.l.b16 %v138
    %v176 = vunpack.c.l.b16 %v139
    %v177 = vunpack.c.l.b16 %v140
    %v178 = vunpack.c.l.b16 %v141
    %v179 = vunpack.c.l.b16 %v142
    %v180 = vpack.c.b16 %v165, %v164
    %v181 = vpack.c.b16 %v167, %v166
    %v182 = vpack.c.b16 %v169, %v168
    %v183 = vpack.c.b16 %v171, %v170
    %v184 = vpack.c.b16 %v173, %v172
    %v185 = vpack.c.b16 %v175, %v174
    %v186 = vpack.c.b16 %v177, %v176
    %v187 = vpack.c.b16 %v179, %v178
    %196 = vmatprep.subr.bf16.mxu0 0
    %197 = vmatpush1.bf16.msra.mxu0 %v187
    %198 = vmatprep.subr.bf16.mxu0 0
    %199 = vmatpush1.bf16.msra.mxu0 %v186
    %200 = vmatprep.subr.bf16.mxu0 0
    %201 = vmatpush1.bf16.msra.mxu0 %v185
    %202 = vmatprep.subr.bf16.mxu0 0
    %203 = vmatpush1.bf16.msra.mxu0 %v184
    %204 = vmatprep.subr.bf16.mxu0 0
    %205 = vmatpush1.bf16.msra.mxu0 %v183
    %206 = vmatprep.subr.bf16.mxu0 0
    %207 = vmatpush1.bf16.msra.mxu0 %v182
    %208 = vmatprep.subr.bf16.mxu0 0
    %209 = vmatpush1.bf16.msra.mxu0 %v181
    %210 = vmatprep.subr.bf16.mxu0 0
    %211 = vmatpush1.bf16.msra.mxu0 %v180
    %212 = vmatprep.subr.bf16.mxu0 0
    %213 = vmatpush2.bf16.msra.mxu0 0
    %214 = vmatprep.subr.bf16.mxu0 0
    %215 = vmatpush2.bf16.msra.mxu0 0
    %216 = vmatprep.subr.bf16.mxu0 0
    %217 = vmatpush2.bf16.msra.mxu0 0
    %218 = vmatprep.subr.bf16.mxu0 0
    %219 = vmatpush2.bf16.msra.mxu0 0
    %220 = vmatprep.subr.bf16.mxu0 0
    %221 = vmatpush2.bf16.msra.mxu0 0
    %222 = vmatprep.subr.bf16.mxu0 0
    %223 = vmatpush2.bf16.msra.mxu0 0
    %224 = vmatprep.subr.bf16.mxu0 0
    %225 = vmatpush2.bf16.msra.mxu0 0
    %226 = vmatprep.subr.bf16.mxu0 0
    %227 = vmatpush2.bf16.msra.mxu0 0
    %228 = vmatprep.mubr.bf16.mxu0 0
    %229 = vmatmul.mubr.bf16.gmra.mxu0 %v126
    %v230 = vpop.f32.mrf.mxu0
    %v231 = vadd.f32 %v147, %v230
    %v232 = vpop.f32.mrf.mxu0
    %v233 = vpop.f32.mrf.mxu0
    %v234 = vpop.f32.mrf.mxu0
    %235 = vdwg.mxu0
    %vm236 = vcmask 1041408
    %v237 = vsel %vm236, %v231, -inf
    %238 = vmax.xlane.f32.xlu0 %v237
    %v239 = vpop.xlane.xlu0 %238
    %v240 = vsub.f32 %v231, %v239
    %v241 = vmul.f32 %v240, 1.442695
    %v242 = vpow.pop %v241
    %v243 = vsel %vm236, %v242, 0.0
    %244 = vadd.xlane.f32.xlu0 %v243
    %v245 = vpop.xlane.xlu0 %244
    %v246 = vrcp.pop %v245
    %v247 = vmul.f32 %v242, %v246
    %vm248 = vcmask 50176
    %249 = vst.msk [vmem:[#allocation8] sm:$0x3] %vm248, %v247
    // Predicated region
    $region30: #{source1_classifier_forward.1} parent=1 // pred_check
      _
    $region31: #{source1_classifier_forward.1} parent=1 // pred_check_branch
      %251 = sbr.rel (0) target = $region33
    $region32: #{source1_classifier_forward.1} parent=1 // pred_region
      %s253 = ssub.s32 32, 32
      %254 = vsyncadd [#allocation4], %s253
      %s256 = sshll.u32 [#allocation8], 4
      %s257 = int_to_ptr.vmem [resolvable:$true] %s256
      %259 = dma.vmem_to_hbm [thread:$0]  %s257, 32, %s4, [#allocation4]
    $region33: #{source1_classifier_forward.1} parent=1 // pred_fallthru
      _
    // Predicated region
    $region34: #{source1_classifier_forward.1} parent=1 // pred_check
      _
    $region35: #{source1_classifier_forward.1} parent=1 // pred_check_branch
      %261 = sbr.rel (0) target = $region37
    $region36: #{source1_classifier_forward.1} parent=1 // pred_region
      %262 = dma.done [#allocation4], 32
    $region37: #{source1_classifier_forward.1} parent=1 // pred_fallthru
      _
    %263 = vsyncpa [#allocation3], 1
    %264 = vsyncpa [#allocation6], 1
    %265 = vsyncpa [#allocation4], 1

</llo_original>
